<compile_context>
chip_gen: v7x
topology: tpu7x:2x2x1
jax: 0.10.0
libtpu: 0.0.40
codegen_flags: <defaults>
</compile_context>

<pallas_src>
import functools

import jax
import jax.numpy as jnp
from jax.experimental import pallas as pl
from jax.experimental.pallas import tpu as pltpu

LANE = 128        # lane width (last dim)
SUBLANE_BF16 = 16 # bf16 sublane packing (second-to-last dim)
MAX_TILE_M = 512  # upper bound on the batch tile (sweepable: 256/512/1024)


def _round_up(x, m):
    return (x + m - 1) // m * m


def _pick_tile_m(n):
    """Batch tile: big enough to amortize grid-step overhead, but keep the
    grid >= 2 on medium batches so v7x's two TensorCores both get work."""
    if n >= 2 * MAX_TILE_M:
        return MAX_TILE_M                         # grid >= 2 automatically
    if n >= 2 * SUBLANE_BF16:
        return _round_up(-(-n // 2), SUBLANE_BF16)  # split in two -> grid == 2
    return _round_up(n, SUBLANE_BF16)             # tiny batch: single tile


def _pad2d(a, rows, cols, dtype):
    out = jnp.zeros((rows, cols), dtype)
    return out.at[: a.shape[0], : a.shape[1]].set(a.astype(dtype))


def _mlp_fused_kernel(*refs, num_layers, negative_slope):
    """refs = (x_ref, w0_ref, b0_ref, ..., w_last_ref, b_last_ref, o_ref).

    x_ref:  (tile_m, ni_pad)       bf16
    w_ref:  (d_in_pad, d_out_pad)  bf16  (full array, VMEM-resident)
    b_ref:  (1, d_out_pad)         f32
    o_ref:  (tile_m, no_pad)       f32
    """
    x_ref = refs[0]
    o_ref = refs[-1]

    h = x_ref[...]  # bf16 activation block; whole chain stays on-chip
    for l in range(num_layers):
        w_ref = refs[1 + 2 * l]
        b_ref = refs[2 + 2 * l]
        # bf16 MXU operands, f32 accumulate.  Layer 0's h is already bf16 so
        # the astype is a no-op there; later layers cast f32 -> bf16 once.
        lhs = h if h.dtype == w_ref.dtype else h.astype(w_ref.dtype)
        y = jnp.dot(lhs, w_ref[...], preferred_element_type=jnp.float32)
        y = y + b_ref[...]                      # f32 epilogue
        if l < num_layers - 1:                  # hidden layers get LeakyReLU
            y = jnp.where(y > 0, y, negative_slope * y)
        h = y
    o_ref[...] = h.astype(o_ref.dtype)


def prepare_mlp_params(hidden_params, out_params):
    """One-time (per-parameter-set) padding + bf16 cast of the weights.

    Each layer given as (W_t, b) with W_t of shape (in, out) — the transpose of
    PyTorch's (out, in) nn.Linear weight.  Returns a list of
    (w_pad bf16 (in_pad, out_pad), b_pad f32 (1, out_pad)) plus (ni, no).
    """
    layers = list(hidden_params) + [out_params]
    padded = []
    for (w_t, b) in layers:
        d_in, d_out = w_t.shape
        d_in_pad = _round_up(d_in, LANE)
        d_out_pad = _round_up(d_out, LANE)
        w_pad = _pad2d(w_t, d_in_pad, d_out_pad, jnp.bfloat16)
        b_pad = _pad2d(b.reshape(1, -1), 1, d_out_pad, jnp.float32)
        padded.append((w_pad, b_pad))
    ni = layers[0][0].shape[0]
    no = layers[-1][0].shape[1]
    return padded, ni, no


def mlp_forward_prepared(x, padded_params, no, *, negative_slope=0.01):
    """Forward pass matching PyTorch MLP.forward, using pre-padded bf16 params.

    x: (N, C, H, W) float32
    padded_params: output of prepare_mlp_params (weights already padded/cast)
    """
    n = x.shape[0]
    h0 = x.reshape(n, -1)                       # x.view(x.size(0), -1)
    ni = h0.shape[1]

    num_layers = len(padded_params)
    ni_pad = padded_params[0][0].shape[0]
    no_pad = padded_params[-1][0].shape[1]
    assert ni_pad >= ni

    # --- batch tiling / x padding (bf16 streamed input) --------------------
    tile_m = _pick_tile_m(n)
    n_pad = _round_up(n, tile_m)

    if n == n_pad and ni == ni_pad:
        x_pad = h0.astype(jnp.bfloat16)          # no pad needed, just cast
    else:
        x_pad = jnp.zeros((n_pad, ni_pad), jnp.bfloat16)
        x_pad = x_pad.at[:n, :ni].set(h0.astype(jnp.bfloat16))

    # --- specs --------------------------------------------------------------
    # Batch-tiled ("parallel") grid; weights/bias use a constant block index so
    # they stay VMEM-resident across batch tiles.
    in_specs = [pl.BlockSpec((tile_m, ni_pad), lambda i: (i, 0))]
    inputs = [x_pad]
    for (w_pad, b_pad) in padded_params:
        in_specs.append(pl.BlockSpec(w_pad.shape, lambda i: (0, 0)))
        in_specs.append(pl.BlockSpec(b_pad.shape, lambda i: (0, 0)))
        inputs.append(w_pad)
        inputs.append(b_pad)

    # --- VMEM budget (double-buffered) & cost estimate ----------------------
    vmem_bytes = 2 * tile_m * ni_pad * 2                      # bf16 x tile x2
    flops = 0
    weight_bytes = 0
    for (w_pad, b_pad) in padded_params:
        d_in_pad, d_out_pad = w_pad.shape
        vmem_bytes += 2 * (d_in_pad * d_out_pad * 2 + 8 * d_out_pad * 4)
        weight_bytes += d_in_pad * d_out_pad * 2 + d_out_pad * 4
        flops += 2 * n_pad * d_in_pad * d_out_pad
    vmem_bytes += 2 * tile_m * no_pad * 4                     # f32 out tile x2
    vmem_limit = min(100 * 1024 * 1024, max(4 * 1024 * 1024, 2 * vmem_bytes))
    bytes_accessed = n_pad * ni_pad * 2 + weight_bytes + n_pad * no_pad * 4

    kernel = functools.partial(
        _mlp_fused_kernel,
        num_layers=num_layers,
        negative_slope=negative_slope,
    )

    # TODO(synk): for much larger layers, add a K ("arbitrary") grid axis with
    # an f32 VMEM accumulator and single-buffered (pl.Buffered(1)) weight specs
    # against v7x's 64 MiB VMEM.
    y_pad = pl.pallas_call(
        kernel,
        out_shape=jax.ShapeDtypeStruct((n_pad, no_pad), jnp.float32),
        grid=(n_pad // tile_m,),
        in_specs=in_specs,
        out_specs=pl.BlockSpec((tile_m, no_pad), lambda i: (i, 0)),
        compiler_params=pltpu.CompilerParams(
            dimension_semantics=("parallel",),
            vmem_limit_bytes=int(vmem_limit),
        ),
        cost_estimate=pl.CostEstimate(
            flops=int(flops),
            transcendentals=0,
            bytes_accessed=int(bytes_accessed),
        ),
    )(*inputs)

    return y_pad[:n, :no]


def init_mlp_params(key, ni, no, nhidden, depth):
    """Deterministic parameters, shapes matching torch.nn.Linear layers.

    Each layer stored as (W_t, b) with W_t of shape (in, out) — i.e. the
    transpose of PyTorch's (out, in) weight layout.
    """
    params = []
    in_dim = ni
    for _ in range(depth):
        key, kw, kb = jax.random.split(key, 3)
        bound = 1.0 / jnp.sqrt(in_dim)
        w_t = jax.random.uniform(kw, (in_dim, nhidden), jnp.float32, -bound, bound)
        b = jax.random.uniform(kb, (nhidden,), jnp.float32, -bound, bound)
        params.append((w_t, b))
        in_dim = nhidden
    if depth == 0:
        in_dim = ni
    key, kw, kb = jax.random.split(key, 3)
    bound = 1.0 / jnp.sqrt(in_dim)
    w_out_t = jax.random.uniform(kw, (in_dim, no), jnp.float32, -bound, bound)
    b_out = jax.random.uniform(kb, (no,), jnp.float32, -bound, bound)
    return params, (w_out_t, b_out)


if __name__ == "__main__":
    # Small, module-consistent shapes: NCHW input (2, 4, 16, 16) -> ni = 1024
    batch, channels, spatial = 2, 4, 16
    ni = channels * spatial * spatial
    no = 10
    nhidden = 32
    depth = 2

    key = jax.random.PRNGKey(0)
    key, kx = jax.random.split(key)
    x = jax.random.normal(kx, (batch, channels, spatial, spatial), jnp.float32)

    hidden_params, out_params = init_mlp_params(key, ni, no, nhidden, depth)

    # Pad/cast the (static) parameters ONCE, outside the per-call path.
    padded_params, ni_chk, no_chk = prepare_mlp_params(hidden_params, out_params)
    padded_params = jax.tree_util.tree_map(jax.block_until_ready, padded_params)
    assert ni_chk == ni and no_chk == no

    fwd = jax.jit(functools.partial(mlp_forward_prepared, no=no))
    y = fwd(x, padded_params)
    y = jax.block_until_ready(y)

    # Reference in plain JAX with the same bf16-operand / f32-accumulate matmul
    # semantics as the kernel (bias + LeakyReLU in f32).
    h_ref = x.reshape(batch, -1)
    for (w_t, b) in hidden_params:
        h_ref = jnp.dot(h_ref.astype(jnp.bfloat16), w_t.astype(jnp.bfloat16),
                        preferred_element_type=jnp.float32) + b
        h_ref = jnp.where(h_ref > 0, h_ref, 0.01 * h_ref)
    w_out_t, b_out = out_params
    y_ref = jnp.dot(h_ref.astype(jnp.bfloat16), w_out_t.astype(jnp.bfloat16),
                    preferred_element_type=jnp.float32) + b_out

    assert y.shape == (batch, no)
    # bf16 matmul operands -> loosened tolerance vs an all-f32 check.
    assert jnp.allclose(y, y_ref, atol=1e-2, rtol=1e-2), float(
        jnp.max(jnp.abs(y - y_ref)))

    print("KERNEL_OK")
</pallas_src>

<mosaic_0001>
module attributes {stable_mosaic.version = 11 : i64} {
  func.func @_mlp_fused_kernel(%arg0: i32, %arg1: memref<16x1024xbf16, #tpu.memory_space<vmem>>, %arg2: memref<1024x128xbf16, #tpu.memory_space<vmem>>, %arg3: memref<1x128xf32, #tpu.memory_space<vmem>>, %arg4: memref<128x128xbf16, #tpu.memory_space<vmem>>, %arg5: memref<1x128xf32, #tpu.memory_space<vmem>>, %arg6: memref<128x128xbf16, #tpu.memory_space<vmem>>, %arg7: memref<1x128xf32, #tpu.memory_space<vmem>>, %arg8: memref<16x128xf32, #tpu.memory_space<vmem>>) attributes {dimension_semantics = [#tpu.dimension_semantics<parallel>], iteration_bounds = array<i64: 1>, scalar_prefetch = 0 : i64, scratch_operands = 0 : i64, tpu.core_type = #tpu.core_type<tc>, window_params = [{transform_indices = @transform_0, window_bounds = array<i64: 16, 1024>}, {pipeline_mode = #tpu.pipeline_mode<synchronous>, transform_indices = @transform_1, window_bounds = array<i64: 1024, 128>}, {pipeline_mode = #tpu.pipeline_mode<synchronous>, transform_indices = @transform_2, window_bounds = array<i64: 1, 128>}, {pipeline_mode = #tpu.pipeline_mode<synchronous>, transform_indices = @transform_3, window_bounds = array<i64: 128, 128>}, {pipeline_mode = #tpu.pipeline_mode<synchronous>, transform_indices = @transform_4, window_bounds = array<i64: 1, 128>}, {pipeline_mode = #tpu.pipeline_mode<synchronous>, transform_indices = @transform_5, window_bounds = array<i64: 128, 128>}, {pipeline_mode = #tpu.pipeline_mode<synchronous>, transform_indices = @transform_6, window_bounds = array<i64: 1, 128>}, {transform_indices = @transform_7, window_bounds = array<i64: 16, 128>}]} {
    %c0 = arith.constant 0 : index
    %c0_0 = arith.constant 0 : index
    %0 = vector.load %arg1[%c0, %c0_0] : memref<16x1024xbf16, #tpu.memory_space<vmem>>, vector<16x1024xbf16>
    %c0_1 = arith.constant 0 : index
    %c0_2 = arith.constant 0 : index
    %1 = vector.load %arg2[%c0_1, %c0_2] : memref<1024x128xbf16, #tpu.memory_space<vmem>>, vector<1024x128xbf16>
    %cst = arith.constant dense<0.000000e+00> : vector<16x128xf32>
    %2 = tpu.matmul %0, %1, %cst {dimension_numbers = #tpu.dot_dimension_numbers<[1], [0], [0], [1], [0, 0, 1, 1], [], []>} : vector<16x1024xbf16>, vector<1024x128xbf16>, vector<16x128xf32> -> vector<16x128xf32>
    %c0_3 = arith.constant 0 : index
    %c0_4 = arith.constant 0 : index
    %3 = vector.load %arg3[%c0_3, %c0_4] : memref<1x128xf32, #tpu.memory_space<vmem>>, vector<1x128xf32>
    %4 = vector.broadcast %3 : vector<1x128xf32> to vector<16x128xf32>
    %5 = arith.addf %2, %4 : vector<16x128xf32>
    %cst_5 = arith.constant 0.000000e+00 : f32
    %6 = vector.broadcast %cst_5 : f32 to vector<16x128xf32>
    %7 = arith.cmpf ogt, %5, %6 : vector<16x128xf32>
    %cst_6 = arith.constant 0.00999999977 : f32
    %8 = vector.broadcast %cst_6 : f32 to vector<16x128xf32>
    %9 = arith.mulf %8, %5 : vector<16x128xf32>
    %10 = arith.select %7, %5, %9 : vector<16x128xi1>, vector<16x128xf32>
    %11 = arith.truncf %10 : vector<16x128xf32> to vector<16x128xbf16>
    %c0_7 = arith.constant 0 : index
    %c0_8 = arith.constant 0 : index
    %12 = vector.load %arg4[%c0_7, %c0_8] : memref<128x128xbf16, #tpu.memory_space<vmem>>, vector<128x128xbf16>
    %cst_9 = arith.constant dense<0.000000e+00> : vector<16x128xf32>
    %13 = tpu.matmul %11, %12, %cst_9 {dimension_numbers = #tpu.dot_dimension_numbers<[1], [0], [0], [1], [0, 0, 1, 1], [], []>} : vector<16x128xbf16>, vector<128x128xbf16>, vector<16x128xf32> -> vector<16x128xf32>
    %c0_10 = arith.constant 0 : index
    %c0_11 = arith.constant 0 : index
    %14 = vector.load %arg5[%c0_10, %c0_11] : memref<1x128xf32, #tpu.memory_space<vmem>>, vector<1x128xf32>
    %15 = vector.broadcast %14 : vector<1x128xf32> to vector<16x128xf32>
    %16 = arith.addf %13, %15 : vector<16x128xf32>
    %cst_12 = arith.constant 0.000000e+00 : f32
    %17 = vector.broadcast %cst_12 : f32 to vector<16x128xf32>
    %18 = arith.cmpf ogt, %16, %17 : vector<16x128xf32>
    %cst_13 = arith.constant 0.00999999977 : f32
    %19 = vector.broadcast %cst_13 : f32 to vector<16x128xf32>
    %20 = arith.mulf %19, %16 : vector<16x128xf32>
    %21 = arith.select %18, %16, %20 : vector<16x128xi1>, vector<16x128xf32>
    %22 = arith.truncf %21 : vector<16x128xf32> to vector<16x128xbf16>
    %c0_14 = arith.constant 0 : index
    %c0_15 = arith.constant 0 : index
    %23 = vector.load %arg6[%c0_14, %c0_15] : memref<128x128xbf16, #tpu.memory_space<vmem>>, vector<128x128xbf16>
    %cst_16 = arith.constant dense<0.000000e+00> : vector<16x128xf32>
    %24 = tpu.matmul %22, %23, %cst_16 {dimension_numbers = #tpu.dot_dimension_numbers<[1], [0], [0], [1], [0, 0, 1, 1], [], []>} : vector<16x128xbf16>, vector<128x128xbf16>, vector<16x128xf32> -> vector<16x128xf32>
    %c0_17 = arith.constant 0 : index
    %c0_18 = arith.constant 0 : index
    %25 = vector.load %arg7[%c0_17, %c0_18] : memref<1x128xf32, #tpu.memory_space<vmem>>, vector<1x128xf32>
    %26 = vector.broadcast %25 : vector<1x128xf32> to vector<16x128xf32>
    %27 = arith.addf %24, %26 : vector<16x128xf32>
    %c0_19 = arith.constant 0 : index
    %c0_20 = arith.constant 0 : index
    %28 = vector.load %arg8[%c0_19, %c0_20] : memref<16x128xf32, #tpu.memory_space<vmem>>, vector<16x128xf32>
    tpu.vector_store %arg8[%c0_19, %c0_20], %27 {strides = array<i32>} : memref<16x128xf32, #tpu.memory_space<vmem>>, vector<16x128xf32>,
    return
  }
  func.func @transform_0(%arg0: i32) -> (i32, i32) {
    %c0_i32 = arith.constant 0 : i32
    %c0_i32_0 = arith.constant 0 : i32
    return %arg0, %c0_i32 : i32, i32
  }
  func.func @transform_1(%arg0: i32) -> (i32, i32) {
    %c0_i32 = arith.constant 0 : i32
    %c0_i32_0 = arith.constant 0 : i32
    %c0_i32_1 = arith.constant 0 : i32
    return %c0_i32, %c0_i32_0 : i32, i32
  }
  func.func @transform_2(%arg0: i32) -> (i32, i32) {
    %c0_i32 = arith.constant 0 : i32
    %c0_i32_0 = arith.constant 0 : i32
    %c0_i32_1 = arith.constant 0 : i32
    return %c0_i32, %c0_i32_0 : i32, i32
  }
  func.func @transform_3(%arg0: i32) -> (i32, i32) {
    %c0_i32 = arith.constant 0 : i32
    %c0_i32_0 = arith.constant 0 : i32
    %c0_i32_1 = arith.constant 0 : i32
    return %c0_i32, %c0_i32_0 : i32, i32
  }
  func.func @transform_4(%arg0: i32) -> (i32, i32) {
    %c0_i32 = arith.constant 0 : i32
    %c0_i32_0 = arith.constant 0 : i32
    %c0_i32_1 = arith.constant 0 : i32
    return %c0_i32, %c0_i32_0 : i32, i32
  }
  func.func @transform_5(%arg0: i32) -> (i32, i32) {
    %c0_i32 = arith.constant 0 : i32
    %c0_i32_0 = arith.constant 0 : i32
    %c0_i32_1 = arith.constant 0 : i32
    return %c0_i32, %c0_i32_0 : i32, i32
  }
  func.func @transform_6(%arg0: i32) -> (i32, i32) {
    %c0_i32 = arith.constant 0 : i32
    %c0_i32_0 = arith.constant 0 : i32
    %c0_i32_1 = arith.constant 0 : i32
    return %c0_i32, %c0_i32_0 : i32, i32
  }
  func.func @transform_7(%arg0: i32) -> (i32, i32) {
    %c0_i32 = arith.constant 0 : i32
    %c0_i32_0 = arith.constant 0 : i32
    return %arg0, %c0_i32 : i32, i32
  }
}

</mosaic_0001>

<llo_original>
// kernel: mlp_forward_prepared.1
$region0: #{mlp_forward_prepared.1}
  #allocation0 [shape = 'u32[]', space=smem, size = 0x4, offset = 0x4, fixed_abs, tag = 'smem constant byte address 0x4 - core index']
  #allocation1 [shape = 'u32[144,128]{1,0:T(1,128)}', space=vmem, size = 0x12000, scoped, tag = 'internal scratch']
  %s0 = inlined_call_operand.vmem [shape: bf16[16,1024], index: 0, kind: input, shape index: {}]
  %s1 = inlined_call_operand.hbm [shape: bf16[1024,128], index: 1, kind: input, shape index: {}]
  %s2 = inlined_call_operand.vmem [shape: f32[1,128], index: 2, kind: input, shape index: {}]
  %s3 = inlined_call_operand.vmem [shape: bf16[128,128], index: 3, kind: input, shape index: {}]
  %s4 = inlined_call_operand.vmem [shape: f32[1,128], index: 4, kind: input, shape index: {}]
  %s5 = inlined_call_operand.vmem [shape: bf16[128,128], index: 5, kind: input, shape index: {}]
  %s6 = inlined_call_operand.vmem [shape: f32[1,128], index: 6, kind: input, shape index: {}]
  %s7 = inlined_call_operand.vmem [shape: f32[16,128], index: 7, kind: output, shape index: {}]
  %s8 = sld [smem:[#allocation0]]
  $region42: #{mlp_forward_prepared.1} parent=0
    _
  %s10 = ssub.s32 1, %s8
  %s11 = scalar_select 0, %s10, %s8
  $region1: #{mlp_forward_prepared.1} parent=0
    #allocation2 [shape = 'u8[262144]{0}', space=vmem, size = 0x40000, scoped, tag = 'input window, operand 1, single buffered']
    #allocation3 [shape = 's32[1]{0}', space=sflag, size = 0x4, scoped, tag = 'scoped memory for mlp_forward_prepared.1']
    %12 = vsyncpa [#allocation3], 0
    // Predicated region
    $region2: #{mlp_forward_prepared.1} parent=1 // pred_check
      _
    $region3: #{mlp_forward_prepared.1} parent=1 // pred_check_branch
      %14 = sbr.rel (0) target = $region5
    $region4: #{mlp_forward_prepared.1} parent=1 // pred_region
      _
    $region5: #{mlp_forward_prepared.1} parent=1 // pred_fallthru
      _
    // Predicated region
    $region6: #{mlp_forward_prepared.1} parent=1 // pred_check
      _
    $region7: #{mlp_forward_prepared.1} parent=1 // pred_check_branch
      %16 = sbr.rel (0) target = $region9
    $region8: #{mlp_forward_prepared.1} parent=1 // pred_region
      %s18 = ssub.s32 8192, 8192
      %19 = vsyncadd [#allocation3], %s18
      %s20 = sshll.u32 [#allocation2], 4
      %s21 = int_to_ptr.vmem [resolvable:$true] %s20
      %26 = dma.hbm_to_vmem [thread:$0]  %s1, 8192, %s21, [#allocation3], 64, 64, 4
    $region9: #{mlp_forward_prepared.1} parent=1 // pred_fallthru
      _
    // Predicated region
    $region10: #{mlp_forward_prepared.1} parent=1 // pred_check
      _
    $region11: #{mlp_forward_prepared.1} parent=1 // pred_check_branch
      %28 = sbr.rel (0) target = $region13
    $region12: #{mlp_forward_prepared.1} parent=1 // pred_region
      _
    $region13: #{mlp_forward_prepared.1} parent=1 // pred_fallthru
      _
    // Predicated region
    $region14: #{mlp_forward_prepared.1} parent=1 // pred_check
      _
    $region15: #{mlp_forward_prepared.1} parent=1 // pred_check_branch
      %30 = sbr.rel (0) target = $region17
    $region16: #{mlp_forward_prepared.1} parent=1 // pred_region
      _
    $region17: #{mlp_forward_prepared.1} parent=1 // pred_fallthru
      _
    // Predicated region
    $region18: #{mlp_forward_prepared.1} parent=1 // pred_check
      _
    $region19: #{mlp_forward_prepared.1} parent=1 // pred_check_branch
      %32 = sbr.rel (0) target = $region21
    $region20: #{mlp_forward_prepared.1} parent=1 // pred_region
      _
    $region21: #{mlp_forward_prepared.1} parent=1 // pred_fallthru
      _
    // Predicated region
    $region22: #{mlp_forward_prepared.1} parent=1 // pred_check
      _
    $region23: #{mlp_forward_prepared.1} parent=1 // pred_check_branch
      %34 = sbr.rel (0) target = $region25
    $region24: #{mlp_forward_prepared.1} parent=1 // pred_region
      _
    $region25: #{mlp_forward_prepared.1} parent=1 // pred_fallthru
      _
    // Predicated region
    $region26: #{mlp_forward_prepared.1} parent=1 // pred_check
      _
    $region27: #{mlp_forward_prepared.1} parent=1 // pred_check_branch
      %36 = sbr.rel (0) target = $region29
    $region28: #{mlp_forward_prepared.1} parent=1 // pred_region
      _
    $region29: #{mlp_forward_prepared.1} parent=1 // pred_fallthru
      _
    // Predicated region
    $region30: #{mlp_forward_prepared.1} parent=1 // pred_check
      _
    $region31: #{mlp_forward_prepared.1} parent=1 // pred_check_branch
      %38 = sbr.rel (0) target = $region33
    $region32: #{mlp_forward_prepared.1} parent=1 // pred_region
      %39 = dma.done [#allocation3], 8192
    $region33: #{mlp_forward_prepared.1} parent=1 // pred_fallthru
      _
    %v41 = vld [vmem:[%s0] sm:$0xff]
    %v42 = vld [vmem:[%s0 + $0x8] sm:$0xff]
    %v43 = vld [vmem:[%s0 + $0x10] sm:$0xff]
    %v44 = vld [vmem:[%s0 + $0x18] sm:$0xff]
    %v45 = vld [vmem:[%s0 + $0x20] sm:$0xff]
    %v46 = vld [vmem:[%s0 + $0x28] sm:$0xff]
    %v47 = vld [vmem:[%s0 + $0x30] sm:$0xff]
    %v48 = vld [vmem:[%s0 + $0x38] sm:$0xff]
    %v49 = vld [vmem:[#allocation2] sm:$0xf]
    %v50 = vld [vmem:[#allocation2 + $0x4] sm:$0xf]
    %v51 = vld [vmem:[#allocation2 + $0x8] sm:$0xf]
    %v52 = vld [vmem:[#allocation2 + $0xc] sm:$0xf]
    %v53 = vld [vmem:[#allocation2 + $0x10] sm:$0xf]
    %v54 = vld [vmem:[#allocation2 + $0x14] sm:$0xf]
    %v55 = vld [vmem:[#allocation2 + $0x18] sm:$0xf]
    %v56 = vld [vmem:[#allocation2 + $0x1c] sm:$0xf]
    %v57 = vld [vmem:[#allocation2 + $0x20] sm:$0xf]
    %v58 = vld [vmem:[#allocation2 + $0x24] sm:$0xf]
    %v59 = vld [vmem:[#allocation2 + $0x28] sm:$0xf]
    %v60 = vld [vmem:[#allocation2 + $0x2c] sm:$0xf]
    %v61 = vld [vmem:[#allocation2 + $0x30] sm:$0xf]
    %v62 = vld [vmem:[#allocation2 + $0x34] sm:$0xf]
    %v63 = vld [vmem:[#allocation2 + $0x38] sm:$0xf]
    %v64 = vld [vmem:[#allocation2 + $0x3c] sm:$0xf]
    %v65 = vld [vmem:[#allocation2 + $0x40] sm:$0xf]
    %v66 = vld [vmem:[#allocation2 + $0x44] sm:$0xf]
    %v67 = vld [vmem:[#allocation2 + $0x48] sm:$0xf]
    %v68 = vld [vmem:[#allocation2 + $0x4c] sm:$0xf]
    %v69 = vld [vmem:[#allocation2 + $0x50] sm:$0xf]
    %v70 = vld [vmem:[#allocation2 + $0x54] sm:$0xf]
    %v71 = vld [vmem:[#allocation2 + $0x58] sm:$0xf]
    %v72 = vld [vmem:[#allocation2 + $0x5c] sm:$0xf]
    %v73 = vld [vmem:[#allocation2 + $0x60] sm:$0xf]
    %v74 = vld [vmem:[#allocation2 + $0x64] sm:$0xf]
    %v75 = vld [vmem:[#allocation2 + $0x68] sm:$0xf]
    %v76 = vld [vmem:[#allocation2 + $0x6c] sm:$0xf]
    %v77 = vld [vmem:[#allocation2 + $0x70] sm:$0xf]
    %v78 = vld [vmem:[#allocation2 + $0x74] sm:$0xf]
    %v79 = vld [vmem:[#allocation2 + $0x78] sm:$0xf]
    %v80 = vld [vmem:[#allocation2 + $0x7c] sm:$0xf]
    %v81 = vld [vmem:[#allocation2 + $0x80] sm:$0xf]
    %v82 = vld [vmem:[#allocation2 + $0x84] sm:$0xf]
    %v83 = vld [vmem:[#allocation2 + $0x88] sm:$0xf]
    %v84 = vld [vmem:[#allocation2 + $0x8c] sm:$0xf]
    %v85 = vld [vmem:[#allocation2 + $0x90] sm:$0xf]
    %v86 = vld [vmem:[#allocation2 + $0x94] sm:$0xf]
    %v87 = vld [vmem:[#allocation2 + $0x98] sm:$0xf]
    %v88 = vld [vmem:[#allocation2 + $0x9c] sm:$0xf]
    %v89 = vld [vmem:[#allocation2 + $0xa0] sm:$0xf]
    %v90 = vld [vmem:[#allocation2 + $0xa4] sm:$0xf]
    %v91 = vld [vmem:[#allocation2 + $0xa8] sm:$0xf]
    %v92 = vld [vmem:[#allocation2 + $0xac] sm:$0xf]
    %v93 = vld [vmem:[#allocation2 + $0xb0] sm:$0xf]
    %v94 = vld [vmem:[#allocation2 + $0xb4] sm:$0xf]
    %v95 = vld [vmem:[#allocation2 + $0xb8] sm:$0xf]
    %v96 = vld [vmem:[#allocation2 + $0xbc] sm:$0xf]
    %v97 = vld [vmem:[#allocation2 + $0xc0] sm:$0xf]
    %v98 = vld [vmem:[#allocation2 + $0xc4] sm:$0xf]
    %v99 = vld [vmem:[#allocation2 + $0xc8] sm:$0xf]
    %v100 = vld [vmem:[#allocation2 + $0xcc] sm:$0xf]
    %v101 = vld [vmem:[#allocation2 + $0xd0] sm:$0xf]
    %v102 = vld [vmem:[#allocation2 + $0xd4] sm:$0xf]
    %v103 = vld [vmem:[#allocation2 + $0xd8] sm:$0xf]
    %v104 = vld [vmem:[#allocation2 + $0xdc] sm:$0xf]
    %v105 = vld [vmem:[#allocation2 + $0xe0] sm:$0xf]
    %v106 = vld [vmem:[#allocation2 + $0xe4] sm:$0xf]
    %v107 = vld [vmem:[#allocation2 + $0xe8] sm:$0xf]
    %v108 = vld [vmem:[#allocation2 + $0xec] sm:$0xf]
    %v109 = vld [vmem:[#allocation2 + $0xf0] sm:$0xf]
    %v110 = vld [vmem:[#allocation2 + $0xf4] sm:$0xf]
    %v111 = vld [vmem:[#allocation2 + $0xf8] sm:$0xf]
    %v112 = vld [vmem:[#allocation2 + $0xfc] sm:$0xf]
    %v113 = vld [vmem:[#allocation2 + $0x100] sm:$0xf]
    %v114 = vld [vmem:[#allocation2 + $0x104] sm:$0xf]
    %v115 = vld [vmem:[#allocation2 + $0x108] sm:$0xf]
    %v116 = vld [vmem:[#allocation2 + $0x10c] sm:$0xf]
    %v117 = vld [vmem:[#allocation2 + $0x110] sm:$0xf]
    %v118 = vld [vmem:[#allocation2 + $0x114] sm:$0xf]
    %v119 = vld [vmem:[#allocation2 + $0x118] sm:$0xf]
    %v120 = vld [vmem:[#allocation2 + $0x11c] sm:$0xf]
    %v121 = vld [vmem:[#allocation2 + $0x120] sm:$0xf]
    %v122 = vld [vmem:[#allocation2 + $0x124] sm:$0xf]
    %v123 = vld [vmem:[#allocation2 + $0x128] sm:$0xf]
    %v124 = vld [vmem:[#allocation2 + $0x12c] sm:$0xf]
    %v125 = vld [vmem:[#allocation2 + $0x130] sm:$0xf]
    %v126 = vld [vmem:[#allocation2 + $0x134] sm:$0xf]
    %v127 = vld [vmem:[#allocation2 + $0x138] sm:$0xf]
    %v128 = vld [vmem:[#allocation2 + $0x13c] sm:$0xf]
    %v129 = vld [vmem:[#allocation2 + $0x140] sm:$0xf]
    %v130 = vld [vmem:[#allocation2 + $0x144] sm:$0xf]
    %v131 = vld [vmem:[#allocation2 + $0x148] sm:$0xf]
    %v132 = vld [vmem:[#allocation2 + $0x14c] sm:$0xf]
    %v133 = vld [vmem:[#allocation2 + $0x150] sm:$0xf]
    %v134 = vld [vmem:[#allocation2 + $0x154] sm:$0xf]
    %v135 = vld [vmem:[#allocation2 + $0x158] sm:$0xf]
    %v136 = vld [vmem:[#allocation2 + $0x15c] sm:$0xf]
    %v137 = vld [vmem:[#allocation2 + $0x160] sm:$0xf]
    %v138 = vld [vmem:[#allocation2 + $0x164] sm:$0xf]
    %v139 = vld [vmem:[#allocation2 + $0x168] sm:$0xf]
    %v140 = vld [vmem:[#allocation2 + $0x16c] sm:$0xf]
    %v141 = vld [vmem:[#allocation2 + $0x170] sm:$0xf]
    %v142 = vld [vmem:[#allocation2 + $0x174] sm:$0xf]
    %v143 = vld [vmem:[#allocation2 + $0x178] sm:$0xf]
    %v144 = vld [vmem:[#allocation2 + $0x17c] sm:$0xf]
    %v145 = vld [vmem:[#allocation2 + $0x180] sm:$0xf]
    %v146 = vld [vmem:[#allocation2 + $0x184] sm:$0xf]
    %v147 = vld [vmem:[#allocation2 + $0x188] sm:$0xf]
    %v148 = vld [vmem:[#allocation2 + $0x18c] sm:$0xf]
    %v149 = vld [vmem:[#allocation2 + $0x190] sm:$0xf]
    %v150 = vld [vmem:[#allocation2 + $0x194] sm:$0xf]
    %v151 = vld [vmem:[#allocation2 + $0x198] sm:$0xf]
    %v152 = vld [vmem:[#allocation2 + $0x19c] sm:$0xf]
    %v153 = vld [vmem:[#allocation2 + $0x1a0] sm:$0xf]
    %v154 = vld [vmem:[#allocation2 + $0x1a4] sm:$0xf]
    %v155 = vld [vmem:[#allocation2 + $0x1a8] sm:$0xf]
    %v156 = vld [vmem:[#allocation2 + $0x1ac] sm:$0xf]
    %v157 = vld [vmem:[#allocation2 + $0x1b0] sm:$0xf]
    %v158 = vld [vmem:[#allocation2 + $0x1b4] sm:$0xf]
    %v159 = vld [vmem:[#allocation2 + $0x1b8] sm:$0xf]
    %v160 = vld [vmem:[#allocation2 + $0x1bc] sm:$0xf]
    %v161 = vld [vmem:[#allocation2 + $0x1c0] sm:$0xf]
    %v162 = vld [vmem:[#allocation2 + $0x1c4] sm:$0xf]
    %v163 = vld [vmem:[#allocation2 + $0x1c8] sm:$0xf]
    %v164 = vld [vmem:[#allocation2 + $0x1cc] sm:$0xf]
    %v165 = vld [vmem:[#allocation2 + $0x1d0] sm:$0xf]
    %v166 = vld [vmem:[#allocation2 + $0x1d4] sm:$0xf]
    %v167 = vld [vmem:[#allocation2 + $0x1d8] sm:$0xf]
    %v168 = vld [vmem:[#allocation2 + $0x1dc] sm:$0xf]
    %v169 = vld [vmem:[#allocation2 + $0x1e0] sm:$0xf]
    %v170 = vld [vmem:[#allocation2 + $0x1e4] sm:$0xf]
    %v171 = vld [vmem:[#allocation2 + $0x1e8] sm:$0xf]
    %v172 = vld [vmem:[#allocation2 + $0x1ec] sm:$0xf]
    %v173 = vld [vmem:[#allocation2 + $0x1f0] sm:$0xf]
    %v174 = vld [vmem:[#allocation2 + $0x1f4] sm:$0xf]
    %v175 = vld [vmem:[#allocation2 + $0x1f8] sm:$0xf]
    %v176 = vld [vmem:[#allocation2 + $0x1fc] sm:$0xf]
    %v177 = vld [vmem:[%s2] sm:$0x1]
    %v179 = vlaneseq
    %v180 = vshrl.u32 %v179, 7
    %v181 = vsub.s32 0, %v180
    %v182 = vrot.slane %v177, %v181
    %v192 = vunpack.c.l.b16 %v41
    %v193 = vunpack.c.h.b16 %v41
    %v194 = vunpack.c.l.b16 %v42
    %v195 = vunpack.c.h.b16 %v42
    %v196 = vunpack.c.l.b16 %v43
    %v197 = vunpack.c.h.b16 %v43
    %v198 = vunpack.c.l.b16 %v44
    %v199 = vunpack.c.h.b16 %v44
    %v200 = vunpack.c.l.b16 %v45
    %v201 = vunpack.c.h.b16 %v45
    %v202 = vunpack.c.l.b16 %v46
    %v203 = vunpack.c.h.b16 %v46
    %v204 = vunpack.c.l.b16 %v47
    %v205 = vunpack.c.h.b16 %v47
    %v206 = vunpack.c.l.b16 %v48
    %v207 = vunpack.c.h.b16 %v48
    %v208 = vpack.c.b16 %v200, %v192
    %v209 = vpack.c.b16 %v201, %v193
    %v210 = vpack.c.b16 %v202, %v194
    %v211 = vpack.c.b16 %v203, %v195
    %v212 = vpack.c.b16 %v204, %v196
    %v213 = vpack.c.b16 %v205, %v197
    %v214 = vpack.c.b16 %v206, %v198
    %v215 = vpack.c.b16 %v207, %v199
    %v352 = vunpack.c.l.b16 %v49
    %v353 = vunpack.c.l.b16 %v50
    %v354 = vunpack.c.l.b16 %v51
    %v355 = vunpack.c.l.b16 %v52
    %v356 = vunpack.c.l.b16 %v53
    %v357 = vunpack.c.l.b16 %v54
    %v358 = vunpack.c.l.b16 %v55
    %v359 = vunpack.c.l.b16 %v56
    %v360 = vunpack.c.l.b16 %v57
    %v361 = vunpack.c.l.b16 %v58
    %v362 = vunpack.c.l.b16 %v59
    %v363 = vunpack.c.l.b16 %v60
    %v364 = vunpack.c.l.b16 %v61
    %v365 = vunpack.c.l.b16 %v62
    %v366 = vunpack.c.l.b16 %v63
    %v367 = vunpack.c.l.b16 %v64
    %v368 = vunpack.c.l.b16 %v65
    %v369 = vunpack.c.l.b16 %v66
    %v370 = vunpack.c.l.b16 %v67
    %v371 = vunpack.c.l.b16 %v68
    %v372 = vunpack.c.l.b16 %v69
    %v373 = vunpack.c.l.b16 %v70
    %v374 = vunpack.c.l.b16 %v71
    %v375 = vunpack.c.l.b16 %v72
    %v376 = vunpack.c.l.b16 %v73
    %v377 = vunpack.c.l.b16 %v74
    %v378 = vunpack.c.l.b16 %v75
    %v379 = vunpack.c.l.b16 %v76
    %v380 = vunpack.c.l.b16 %v77
    %v381 = vunpack.c.l.b16 %v78
    %v382 = vunpack.c.l.b16 %v79
    %v383 = vunpack.c.l.b16 %v80
    %v384 = vunpack.c.l.b16 %v81
    %v385 = vunpack.c.l.b16 %v82
    %v386 = vunpack.c.l.b16 %v83
    %v387 = vunpack.c.l.b16 %v84
    %v388 = vunpack.c.l.b16 %v85
    %v389 = vunpack.c.l.b16 %v86
    %v390 = vunpack.c.l.b16 %v87
    %v391 = vunpack.c.l.b16 %v88
    %v392 = vunpack.c.l.b16 %v89
    %v393 = vunpack.c.l.b16 %v90
    %v394 = vunpack.c.l.b16 %v91
    %v395 = vunpack.c.l.b16 %v92
    %v396 = vunpack.c.l.b16 %v93
    %v397 = vunpack.c.l.b16 %v94
    %v398 = vunpack.c.l.b16 %v95
    %v399 = vunpack.c.l.b16 %v96
    %v400 = vunpack.c.l.b16 %v97
    %v401 = vunpack.c.l.b16 %v98
    %v402 = vunpack.c.l.b16 %v99
    %v403 = vunpack.c.l.b16 %v100
    %v404 = vunpack.c.l.b16 %v101
    %v405 = vunpack.c.l.b16 %v102
    %v406 = vunpack.c.l.b16 %v103
    %v407 = vunpack.c.l.b16 %v104
    %v408 = vunpack.c.l.b16 %v105
    %v409 = vunpack.c.l.b16 %v106
    %v410 = vunpack.c.l.b16 %v107
    %v411 = vunpack.c.l.b16 %v108
    %v412 = vunpack.c.l.b16 %v109
    %v413 = vunpack.c.l.b16 %v110
    %v414 = vunpack.c.l.b16 %v111
    %v415 = vunpack.c.l.b16 %v112
    %v416 = vunpack.c.l.b16 %v113
    %v417 = vunpack.c.l.b16 %v114
    %v418 = vunpack.c.l.b16 %v115
    %v419 = vunpack.c.l.b16 %v116
    %v420 = vunpack.c.l.b16 %v117
    %v421 = vunpack.c.l.b16 %v118
    %v422 = vunpack.c.l.b16 %v119
    %v423 = vunpack.c.l.b16 %v120
    %v424 = vunpack.c.l.b16 %v121
    %v425 = vunpack.c.l.b16 %v122
    %v426 = vunpack.c.l.b16 %v123
    %v427 = vunpack.c.l.b16 %v124
    %v428 = vunpack.c.l.b16 %v125
    %v429 = vunpack.c.l.b16 %v126
    %v430 = vunpack.c.l.b16 %v127
    %v431 = vunpack.c.l.b16 %v128
    %v432 = vunpack.c.l.b16 %v129
    %v433 = vunpack.c.l.b16 %v130
    %v434 = vunpack.c.l.b16 %v131
    %v435 = vunpack.c.l.b16 %v132
    %v436 = vunpack.c.l.b16 %v133
    %v437 = vunpack.c.l.b16 %v134
    %v438 = vunpack.c.l.b16 %v135
    %v439 = vunpack.c.l.b16 %v136
    %v440 = vunpack.c.l.b16 %v137
    %v441 = vunpack.c.l.b16 %v138
    %v442 = vunpack.c.l.b16 %v139
    %v443 = vunpack.c.l.b16 %v140
    %v444 = vunpack.c.l.b16 %v141
    %v445 = vunpack.c.l.b16 %v142
    %v446 = vunpack.c.l.b16 %v143
    %v447 = vunpack.c.l.b16 %v144
    %v448 = vunpack.c.l.b16 %v145
    %v449 = vunpack.c.l.b16 %v146
    %v450 = vunpack.c.l.b16 %v147
    %v451 = vunpack.c.l.b16 %v148
    %v452 = vunpack.c.l.b16 %v149
    %v453 = vunpack.c.l.b16 %v150
    %v454 = vunpack.c.l.b16 %v151
    %v455 = vunpack.c.l.b16 %v152
    %v456 = vunpack.c.l.b16 %v153
    %v457 = vunpack.c.l.b16 %v154
    %v458 = vunpack.c.l.b16 %v155
    %v459 = vunpack.c.l.b16 %v156
    %v460 = vunpack.c.l.b16 %v157
    %v461 = vunpack.c.l.b16 %v158
    %v462 = vunpack.c.l.b16 %v159
    %v463 = vunpack.c.l.b16 %v160
    %v464 = vunpack.c.l.b16 %v161
    %v465 = vunpack.c.l.b16 %v162
    %v466 = vunpack.c.l.b16 %v163
    %v467 = vunpack.c.l.b16 %v164
    %v468 = vunpack.c.l.b16 %v165
    %v469 = vunpack.c.l.b16 %v166
    %v470 = vunpack.c.l.b16 %v167
    %v471 = vunpack.c.l.b16 %v168
    %v472 = vunpack.c.l.b16 %v169
    %v473 = vunpack.c.l.b16 %v170
    %v474 = vunpack.c.l.b16 %v171
    %v475 = vunpack.c.l.b16 %v172
    %v476 = vunpack.c.l.b16 %v173
    %v477 = vunpack.c.l.b16 %v174
    %v478 = vunpack.c.l.b16 %v175
    %v479 = vunpack.c.l.b16 %v176
    %v480 = vpack.c.b16 %v353, %v352
    %v481 = vpack.c.b16 %v355, %v354
    %v482 = vpack.c.b16 %v357, %v356
    %v483 = vpack.c.b16 %v359, %v358
    %v484 = vpack.c.b16 %v361, %v360
    %v485 = vpack.c.b16 %v363, %v362
    %v486 = vpack.c.b16 %v365, %v364
    %v487 = vpack.c.b16 %v367, %v366
    %v488 = vpack.c.b16 %v369, %v368
    %v489 = vpack.c.b16 %v371, %v370
    %v490 = vpack.c.b16 %v373, %v372
    %v491 = vpack.c.b16 %v375, %v374
    %v492 = vpack.c.b16 %v377, %v376
    %v493 = vpack.c.b16 %v379, %v378
    %v494 = vpack.c.b16 %v381, %v380
    %v495 = vpack.c.b16 %v383, %v382
    %v496 = vpack.c.b16 %v385, %v384
    %v497 = vpack.c.b16 %v387, %v386
    %v498 = vpack.c.b16 %v389, %v388
    %v499 = vpack.c.b16 %v391, %v390
    %v500 = vpack.c.b16 %v393, %v392
    %v501 = vpack.c.b16 %v395, %v394
    %v502 = vpack.c.b16 %v397, %v396
    %v503 = vpack.c.b16 %v399, %v398
    %v504 = vpack.c.b16 %v401, %v400
    %v505 = vpack.c.b16 %v403, %v402
    %v506 = vpack.c.b16 %v405, %v404
    %v507 = vpack.c.b16 %v407, %v406
    %v508 = vpack.c.b16 %v409, %v408
    %v509 = vpack.c.b16 %v411, %v410
    %v510 = vpack.c.b16 %v413, %v412
    %v511 = vpack.c.b16 %v415, %v414
    %v512 = vpack.c.b16 %v417, %v416
    %v513 = vpack.c.b16 %v419, %v418
    %v514 = vpack.c.b16 %v421, %v420
    %v515 = vpack.c.b16 %v423, %v422
    %v516 = vpack.c.b16 %v425, %v424
    %v517 = vpack.c.b16 %v427, %v426
    %v518 = vpack.c.b16 %v429, %v428
    %v519 = vpack.c.b16 %v431, %v430
    %v520 = vpack.c.b16 %v433, %v432
    %v521 = vpack.c.b16 %v435, %v434
    %v522 = vpack.c.b16 %v437, %v436
    %v523 = vpack.c.b16 %v439, %v438
    %v524 = vpack.c.b16 %v441, %v440
    %v525 = vpack.c.b16 %v443, %v442
    %v526 = vpack.c.b16 %v445, %v444
    %v527 = vpack.c.b16 %v447, %v446
    %v528 = vpack.c.b16 %v449, %v448
    %v529 = vpack.c.b16 %v451, %v450
    %v530 = vpack.c.b16 %v453, %v452
    %v531 = vpack.c.b16 %v455, %v454
    %v532 = vpack.c.b16 %v457, %v456
    %v533 = vpack.c.b16 %v459, %v458
    %v534 = vpack.c.b16 %v461, %v460
    %v535 = vpack.c.b16 %v463, %v462
    %v536 = vpack.c.b16 %v465, %v464
    %v537 = vpack.c.b16 %v467, %v466
    %v538 = vpack.c.b16 %v469, %v468
    %v539 = vpack.c.b16 %v471, %v470
    %v540 = vpack.c.b16 %v473, %v472
    %v541 = vpack.c.b16 %v475, %v474
    %v542 = vpack.c.b16 %v477, %v476
    %v543 = vpack.c.b16 %v479, %v478
    %608 = vmatprep.subr.bf16.mxu0 0
    %609 = vmatpush1.bf16.msra.mxu0 %v480
    %610 = vmatprep.subr.bf16.mxu0 0
    %611 = vmatpush1.bf16.msra.mxu0 %v481
    %612 = vmatprep.subr.bf16.mxu0 0
    %613 = vmatpush1.bf16.msra.mxu0 %v482
    %614 = vmatprep.subr.bf16.mxu0 0
    %615 = vmatpush1.bf16.msra.mxu0 %v483
    %616 = vmatprep.subr.bf16.mxu0 0
    %617 = vmatpush1.bf16.msra.mxu0 %v484
    %618 = vmatprep.subr.bf16.mxu0 0
    %619 = vmatpush1.bf16.msra.mxu0 %v485
    %620 = vmatprep.subr.bf16.mxu0 0
    %621 = vmatpush1.bf16.msra.mxu0 %v486
    %622 = vmatprep.subr.bf16.mxu0 0
    %623 = vmatpush1.bf16.msra.mxu0 %v487
    %624 = vmatprep.subr.bf16.mxu0 0
    %625 = vmatpush1.bf16.msra.mxu0 %v488
    %626 = vmatprep.subr.bf16.mxu0 0
    %627 = vmatpush1.bf16.msra.mxu0 %v489
    %628 = vmatprep.subr.bf16.mxu0 0
    %629 = vmatpush1.bf16.msra.mxu0 %v490
    %630 = vmatprep.subr.bf16.mxu0 0
    %631 = vmatpush1.bf16.msra.mxu0 %v491
    %632 = vmatprep.subr.bf16.mxu0 0
    %633 = vmatpush1.bf16.msra.mxu0 %v492
    %634 = vmatprep.subr.bf16.mxu0 0
    %635 = vmatpush1.bf16.msra.mxu0 %v493
    %636 = vmatprep.subr.bf16.mxu0 0
    %637 = vmatpush1.bf16.msra.mxu0 %v494
    %638 = vmatprep.subr.bf16.mxu0 0
    %639 = vmatpush1.bf16.msra.mxu0 %v495
    %640 = vmatprep.mubr.bf16.mxu0 %v209
    %641 = vmatmul.mubr.bf16.gmra.mrb[0].mxu0 %v208
    %v642 = vpop.f32.mrb[0].mxu0
    %v643 = vadd.f32 %v182, %v642
    %v644 = vpop.f32.mrb[0].mxu0
    %v645 = vpop.f32.mrb[0].mxu0
    %v646 = vadd.f32 %v182, %v645
    %v647 = vpop.f32.mrb[0].mxu0
    %648 = vdwg.mxu0
    %649 = vmatprep.subr.bf16.mxu0 0
    %650 = vmatpush1.bf16.msra.mxu0 %v496
    %651 = vmatprep.subr.bf16.mxu0 0
    %652 = vmatpush1.bf16.msra.mxu0 %v497
    %653 = vmatprep.subr.bf16.mxu0 0
    %654 = vmatpush1.bf16.msra.mxu0 %v498
    %655 = vmatprep.subr.bf16.mxu0 0
    %656 = vmatpush1.bf16.msra.mxu0 %v499
    %657 = vmatprep.subr.bf16.mxu0 0
    %658 = vmatpush1.bf16.msra.mxu0 %v500
    %659 = vmatprep.subr.bf16.mxu0 0
    %660 = vmatpush1.bf16.msra.mxu0 %v501
    %661 = vmatprep.subr.bf16.mxu0 0
    %662 = vmatpush1.bf16.msra.mxu0 %v502
    %663 = vmatprep.subr.bf16.mxu0 0
    %664 = vmatpush1.bf16.msra.mxu0 %v503
    %665 = vmatprep.subr.bf16.mxu0 0
    %666 = vmatpush1.bf16.msra.mxu0 %v504
    %667 = vmatprep.subr.bf16.mxu0 0
    %668 = vmatpush1.bf16.msra.mxu0 %v505
    %669 = vmatprep.subr.bf16.mxu0 0
    %670 = vmatpush1.bf16.msra.mxu0 %v506
    %671 = vmatprep.subr.bf16.mxu0 0
    %672 = vmatpush1.bf16.msra.mxu0 %v507
    %673 = vmatprep.subr.bf16.mxu0 0
    %674 = vmatpush1.bf16.msra.mxu0 %v508
    %675 = vmatprep.subr.bf16.mxu0 0
    %676 = vmatpush1.bf16.msra.mxu0 %v509
    %677 = vmatprep.subr.bf16.mxu0 0
    %678 = vmatpush1.bf16.msra.mxu0 %v510
    %679 = vmatprep.subr.bf16.mxu0 0
    %680 = vmatpush1.bf16.msra.mxu0 %v511
    %681 = vmatprep.mubr.bf16.mxu0 %v211
    %682 = vmatmul.mubr.bf16.gmra.mrb[0].mxu0 %v210
    %v683 = vpop.f32.mrb[0].mxu0
    %v684 = vadd.f32 %v643, %v683
    %v685 = vpop.f32.mrb[0].mxu0
    %v686 = vpop.f32.mrb[0].mxu0
    %v687 = vadd.f32 %v646, %v686
    %v688 = vpop.f32.mrb[0].mxu0
    %689 = vdwg.mxu0
    %690 = vmatprep.subr.bf16.mxu0 0
    %691 = vmatpush1.bf16.msra.mxu0 %v512
    %692 = vmatprep.subr.bf16.mxu0 0
    %693 = vmatpush1.bf16.msra.mxu0 %v513
    %694 = vmatprep.subr.bf16.mxu0 0
    %695 = vmatpush1.bf16.msra.mxu0 %v514
    %696 = vmatprep.subr.bf16.mxu0 0
    %697 = vmatpush1.bf16.msra.mxu0 %v515
    %698 = vmatprep.subr.bf16.mxu0 0
    %699 = vmatpush1.bf16.msra.mxu0 %v516
    %700 = vmatprep.subr.bf16.mxu0 0
    %701 = vmatpush1.bf16.msra.mxu0 %v517
    %702 = vmatprep.subr.bf16.mxu0 0
    %703 = vmatpush1.bf16.msra.mxu0 %v518
    %704 = vmatprep.subr.bf16.mxu0 0
    %705 = vmatpush1.bf16.msra.mxu0 %v519
    %706 = vmatprep.subr.bf16.mxu0 0
    %707 = vmatpush1.bf16.msra.mxu0 %v520
    %708 = vmatprep.subr.bf16.mxu0 0
    %709 = vmatpush1.bf16.msra.mxu0 %v521
    %710 = vmatprep.subr.bf16.mxu0 0
    %711 = vmatpush1.bf16.msra.mxu0 %v522
    %712 = vmatprep.subr.bf16.mxu0 0
    %713 = vmatpush1.bf16.msra.mxu0 %v523
    %714 = vmatprep.subr.bf16.mxu0 0
    %715 = vmatpush1.bf16.msra.mxu0 %v524
    %716 = vmatprep.subr.bf16.mxu0 0
    %717 = vmatpush1.bf16.msra.mxu0 %v525
    %718 = vmatprep.subr.bf16.mxu0 0
    %719 = vmatpush1.bf16.msra.mxu0 %v526
    %720 = vmatprep.subr.bf16.mxu0 0
    %721 = vmatpush1.bf16.msra.mxu0 %v527
    %722 = vmatprep.mubr.bf16.mxu0 %v213
    %723 = vmatmul.mubr.bf16.gmra.mrb[0].mxu0 %v212
    %v724 = vpop.f32.mrb[0].mxu0
    %v725 = vadd.f32 %v684, %v724
    %v726 = vpop.f32.mrb[0].mxu0
    %v727 = vpop.f32.mrb[0].mxu0
    %v728 = vadd.f32 %v687, %v727
    %v729 = vpop.f32.mrb[0].mxu0
    %730 = vdwg.mxu0
    %731 = vmatprep.subr.bf16.mxu0 0
    %732 = vmatpush1.bf16.msra.mxu0 %v528
    %733 = vmatprep.subr.bf16.mxu0 0
    %734 = vmatpush1.bf16.msra.mxu0 %v529
    %735 = vmatprep.subr.bf16.mxu0 0
    %736 = vmatpush1.bf16.msra.mxu0 %v530
    %737 = vmatprep.subr.bf16.mxu0 0
    %738 = vmatpush1.bf16.msra.mxu0 %v531
    %739 = vmatprep.subr.bf16.mxu0 0
    %740 = vmatpush1.bf16.msra.mxu0 %v532
    %741 = vmatprep.subr.bf16.mxu0 0
    %742 = vmatpush1.bf16.msra.mxu0 %v533
    %743 = vmatprep.subr.bf16.mxu0 0
    %744 = vmatpush1.bf16.msra.mxu0 %v534
    %745 = vmatprep.subr.bf16.mxu0 0
    %746 = vmatpush1.bf16.msra.mxu0 %v535
    %747 = vmatprep.subr.bf16.mxu0 0
    %748 = vmatpush1.bf16.msra.mxu0 %v536
    %749 = vmatprep.subr.bf16.mxu0 0
    %750 = vmatpush1.bf16.msra.mxu0 %v537
    %751 = vmatprep.subr.bf16.mxu0 0
    %752 = vmatpush1.bf16.msra.mxu0 %v538
    %753 = vmatprep.subr.bf16.mxu0 0
    %754 = vmatpush1.bf16.msra.mxu0 %v539
    %755 = vmatprep.subr.bf16.mxu0 0
    %756 = vmatpush1.bf16.msra.mxu0 %v540
    %757 = vmatprep.subr.bf16.mxu0 0
    %758 = vmatpush1.bf16.msra.mxu0 %v541
    %759 = vmatprep.subr.bf16.mxu0 0
    %760 = vmatpush1.bf16.msra.mxu0 %v542
    %761 = vmatprep.subr.bf16.mxu0 0
    %762 = vmatpush1.bf16.msra.mxu0 %v543
    %763 = vmatprep.mubr.bf16.mxu0 %v215
    %764 = vmatmul.mubr.bf16.gmra.mrb[0].mxu0 %v214
    %v765 = vpop.f32.mrb[0].mxu0
    %v766 = vadd.f32 %v725, %v765
    %v767 = vpop.f32.mrb[0].mxu0
    %v768 = vpop.f32.mrb[0].mxu0
    %v769 = vadd.f32 %v728, %v768
    %v770 = vpop.f32.mrb[0].mxu0
    %771 = vdwg.mxu0
    %vm772 = vcmp.gt.f32.partialorder %v766, 0.0
    %vm773 = vcmp.gt.f32.partialorder %v769, 0.0
    %v774 = vmul.f32 %v766, 0.01
    %v775 = vmul.f32 %v769, 0.01
    %v776 = vsel %vm772, %v766, %v774
    %v777 = vsel %vm773, %v769, %v775
    %v778 = vpack.c.bf16 %v777, %v776
    %v779 = vld [vmem:[%s3] sm:$0xf]
    %v780 = vld [vmem:[%s3 + $0x4] sm:$0xf]
    %v781 = vld [vmem:[%s3 + $0x8] sm:$0xf]
    %v782 = vld [vmem:[%s3 + $0xc] sm:$0xf]
    %v783 = vld [vmem:[%s3 + $0x10] sm:$0xf]
    %v784 = vld [vmem:[%s3 + $0x14] sm:$0xf]
    %v785 = vld [vmem:[%s3 + $0x18] sm:$0xf]
    %v786 = vld [vmem:[%s3 + $0x1c] sm:$0xf]
    %v787 = vld [vmem:[%s3 + $0x20] sm:$0xf]
    %v788 = vld [vmem:[%s3 + $0x24] sm:$0xf]
    %v789 = vld [vmem:[%s3 + $0x28] sm:$0xf]
    %v790 = vld [vmem:[%s3 + $0x2c] sm:$0xf]
    %v791 = vld [vmem:[%s3 + $0x30] sm:$0xf]
    %v792 = vld [vmem:[%s3 + $0x34] sm:$0xf]
    %v793 = vld [vmem:[%s3 + $0x38] sm:$0xf]
    %v794 = vld [vmem:[%s3 + $0x3c] sm:$0xf]
    %v795 = vld [vmem:[%s4] sm:$0x1]
    %v797 = vlaneseq
    %v798 = vshrl.u32 %v797, 7
    %v799 = vsub.s32 0, %v798
    %v800 = vrot.slane %v795, %v799
    %v818 = vunpack.c.l.b16 %v779
    %v819 = vunpack.c.l.b16 %v780
    %v820 = vunpack.c.l.b16 %v781
    %v821 = vunpack.c.l.b16 %v782
    %v822 = vunpack.c.l.b16 %v783
    %v823 = vunpack.c.l.b16 %v784
    %v824 = vunpack.c.l.b16 %v785
    %v825 = vunpack.c.l.b16 %v786
    %v826 = vunpack.c.l.b16 %v787
    %v827 = vunpack.c.l.b16 %v788
    %v828 = vunpack.c.l.b16 %v789
    %v829 = vunpack.c.l.b16 %v790
    %v830 = vunpack.c.l.b16 %v791
    %v831 = vunpack.c.l.b16 %v792
    %v832 = vunpack.c.l.b16 %v793
    %v833 = vunpack.c.l.b16 %v794
    %v834 = vpack.c.b16 %v819, %v818
    %v835 = vpack.c.b16 %v821, %v820
    %v836 = vpack.c.b16 %v823, %v822
    %v837 = vpack.c.b16 %v825, %v824
    %v838 = vpack.c.b16 %v827, %v826
    %v839 = vpack.c.b16 %v829, %v828
    %v840 = vpack.c.b16 %v831, %v830
    %v841 = vpack.c.b16 %v833, %v832
    %850 = vmatprep.subr.bf16.mxu0 0
    %851 = vmatpush1.bf16.msra.mxu0 %v834
    %852 = vmatprep.subr.bf16.mxu0 0
    %853 = vmatpush1.bf16.msra.mxu0 %v835
    %854 = vmatprep.subr.bf16.mxu0 0
    %855 = vmatpush1.bf16.msra.mxu0 %v836
    %856 = vmatprep.subr.bf16.mxu0 0
    %857 = vmatpush1.bf16.msra.mxu0 %v837
    %858 = vmatprep.subr.bf16.mxu0 0
    %859 = vmatpush1.bf16.msra.mxu0 %v838
    %860 = vmatprep.subr.bf16.mxu0 0
    %861 = vmatpush1.bf16.msra.mxu0 %v839
    %862 = vmatprep.subr.bf16.mxu0 0
    %863 = vmatpush1.bf16.msra.mxu0 %v840
    %864 = vmatprep.subr.bf16.mxu0 0
    %865 = vmatpush1.bf16.msra.mxu0 %v841
    %866 = vmatprep.subr.bf16.mxu0 0
    %867 = vmatpush1.bf16.msra.mxu0 0
    %868 = vmatprep.subr.bf16.mxu0 0
    %869 = vmatpush1.bf16.msra.mxu0 0
    %870 = vmatprep.subr.bf16.mxu0 0
    %871 = vmatpush1.bf16.msra.mxu0 0
    %872 = vmatprep.subr.bf16.mxu0 0
    %873 = vmatpush1.bf16.msra.mxu0 0
    %874 = vmatprep.subr.bf16.mxu0 0
    %875 = vmatpush1.bf16.msra.mxu0 0
    %876 = vmatprep.subr.bf16.mxu0 0
    %877 = vmatpush1.bf16.msra.mxu0 0
    %878 = vmatprep.subr.bf16.mxu0 0
    %879 = vmatpush1.bf16.msra.mxu0 0
    %880 = vmatprep.subr.bf16.mxu0 0
    %881 = vmatpush1.bf16.msra.mxu0 0
    %882 = vmatprep.mubr.bf16.mxu0 0
    %883 = vmatmul.mubr.bf16.gmra.mrb[0].mxu0 %v778
    %v884 = vpop.f32.mrb[0].mxu0
    %v885 = vadd.f32 %v800, %v884
    %v886 = vpop.f32.mrb[0].mxu0
    %v887 = vpop.f32.mrb[0].mxu0
    %v888 = vadd.f32 %v800, %v887
    %v889 = vpop.f32.mrb[0].mxu0
    %890 = vdwg.mxu0
    %vm891 = vcmp.gt.f32.partialorder %v885, 0.0
    %vm892 = vcmp.gt.f32.partialorder %v888, 0.0
    %v893 = vmul.f32 %v885, 0.01
    %v894 = vmul.f32 %v888, 0.01
    %v895 = vsel %vm891, %v885, %v893
    %v896 = vsel %vm892, %v888, %v894
    %v897 = vpack.c.bf16 %v896, %v895
    %v898 = vld [vmem:[%s5] sm:$0xf]
    %v899 = vld [vmem:[%s5 + $0x4] sm:$0xf]
    %v900 = vld [vmem:[%s5 + $0x8] sm:$0xf]
    %v901 = vld [vmem:[%s5 + $0xc] sm:$0xf]
    %v902 = vld [vmem:[%s5 + $0x10] sm:$0xf]
    %v903 = vld [vmem:[%s5 + $0x14] sm:$0xf]
    %v904 = vld [vmem:[%s5 + $0x18] sm:$0xf]
    %v905 = vld [vmem:[%s5 + $0x1c] sm:$0xf]
    %v906 = vld [vmem:[%s5 + $0x20] sm:$0xf]
    %v907 = vld [vmem:[%s5 + $0x24] sm:$0xf]
    %v908 = vld [vmem:[%s5 + $0x28] sm:$0xf]
    %v909 = vld [vmem:[%s5 + $0x2c] sm:$0xf]
    %v910 = vld [vmem:[%s5 + $0x30] sm:$0xf]
    %v911 = vld [vmem:[%s5 + $0x34] sm:$0xf]
    %v912 = vld [vmem:[%s5 + $0x38] sm:$0xf]
    %v913 = vld [vmem:[%s5 + $0x3c] sm:$0xf]
    %v914 = vld [vmem:[%s6] sm:$0x1]
    %v916 = vlaneseq
    %v917 = vshrl.u32 %v916, 7
    %v918 = vsub.s32 0, %v917
    %v919 = vrot.slane %v914, %v918
    %v937 = vunpack.c.l.b16 %v898
    %v938 = vunpack.c.l.b16 %v899
    %v939 = vunpack.c.l.b16 %v900
    %v940 = vunpack.c.l.b16 %v901
    %v941 = vunpack.c.l.b16 %v902
    %v942 = vunpack.c.l.b16 %v903
    %v943 = vunpack.c.l.b16 %v904
    %v944 = vunpack.c.l.b16 %v905
    %v945 = vunpack.c.l.b16 %v906
    %v946 = vunpack.c.l.b16 %v907
    %v947 = vunpack.c.l.b16 %v908
    %v948 = vunpack.c.l.b16 %v909
    %v949 = vunpack.c.l.b16 %v910
    %v950 = vunpack.c.l.b16 %v911
    %v951 = vunpack.c.l.b16 %v912
    %v952 = vunpack.c.l.b16 %v913
    %v953 = vpack.c.b16 %v938, %v937
    %v954 = vpack.c.b16 %v940, %v939
    %v955 = vpack.c.b16 %v942, %v941
    %v956 = vpack.c.b16 %v944, %v943
    %v957 = vpack.c.b16 %v946, %v945
    %v958 = vpack.c.b16 %v948, %v947
    %v959 = vpack.c.b16 %v950, %v949
    %v960 = vpack.c.b16 %v952, %v951
    %969 = vmatprep.subr.bf16.mxu0 0
    %970 = vmatpush1.bf16.msra.mxu0 %v953
    %971 = vmatprep.subr.bf16.mxu0 0
    %972 = vmatpush1.bf16.msra.mxu0 %v954
    %973 = vmatprep.subr.bf16.mxu0 0
    %974 = vmatpush1.bf16.msra.mxu0 %v955
    %975 = vmatprep.subr.bf16.mxu0 0
    %976 = vmatpush1.bf16.msra.mxu0 %v956
    %977 = vmatprep.subr.bf16.mxu0 0
    %978 = vmatpush1.bf16.msra.mxu0 %v957
    %979 = vmatprep.subr.bf16.mxu0 0
    %980 = vmatpush1.bf16.msra.mxu0 %v958
    %981 = vmatprep.subr.bf16.mxu0 0
    %982 = vmatpush1.bf16.msra.mxu0 %v959
    %983 = vmatprep.subr.bf16.mxu0 0
    %984 = vmatpush1.bf16.msra.mxu0 %v960
    %985 = vmatprep.subr.bf16.mxu0 0
    %986 = vmatpush1.bf16.msra.mxu0 0
    %987 = vmatprep.subr.bf16.mxu0 0
    %988 = vmatpush1.bf16.msra.mxu0 0
    %989 = vmatprep.subr.bf16.mxu0 0
    %990 = vmatpush1.bf16.msra.mxu0 0
    %991 = vmatprep.subr.bf16.mxu0 0
    %992 = vmatpush1.bf16.msra.mxu0 0
    %993 = vmatprep.subr.bf16.mxu0 0
    %994 = vmatpush1.bf16.msra.mxu0 0
    %995 = vmatprep.subr.bf16.mxu0 0
    %996 = vmatpush1.bf16.msra.mxu0 0
    %997 = vmatprep.subr.bf16.mxu0 0
    %998 = vmatpush1.bf16.msra.mxu0 0
    %999 = vmatprep.subr.bf16.mxu0 0
    %1000 = vmatpush1.bf16.msra.mxu0 0
    %1001 = vmatprep.mubr.bf16.mxu0 0
    %1002 = vmatmul.mubr.bf16.gmra.mrb[0].mxu0 %v897
    %v1003 = vpop.f32.mrb[0].mxu0
    %v1004 = vadd.f32 %v919, %v1003
    %v1005 = vpop.f32.mrb[0].mxu0
    %v1006 = vpop.f32.mrb[0].mxu0
    %v1007 = vadd.f32 %v919, %v1006
    %v1008 = vpop.f32.mrb[0].mxu0
    %1009 = vdwg.mxu0
    %1010 = vst [vmem:[%s7] sm:$0xff] %v1004
    %1011 = vst [vmem:[%s7 + $0x8] sm:$0xff] %v1007
    // Predicated region
    $region34: #{mlp_forward_prepared.1} parent=1 // pred_check
      _
    $region35: #{mlp_forward_prepared.1} parent=1 // pred_check_branch
      %1013 = sbr.rel (0) target = $region37
    $region36: #{mlp_forward_prepared.1} parent=1 // pred_region
      _
    $region37: #{mlp_forward_prepared.1} parent=1 // pred_fallthru
      _
    // Predicated region
    $region38: #{mlp_forward_prepared.1} parent=1 // pred_check
      _
    $region39: #{mlp_forward_prepared.1} parent=1 // pred_check_branch
      %1015 = sbr.rel (0) target = $region41
    $region40: #{mlp_forward_prepared.1} parent=1 // pred_region
      _
    $region41: #{mlp_forward_prepared.1} parent=1 // pred_fallthru
      _
    %1016 = vsyncpa [#allocation3], 1

</llo_original>
